<compile_context>
chip_gen: v5e
topology: v5e:2x2
jax: 0.10.0
libtpu: 0.0.40
codegen_flags: <defaults>
</compile_context>

<pallas_src>
import functools

import jax
import jax.numpy as jnp
from jax.experimental import pallas as pl
from jax.experimental.pallas import tpu as pltpu


def _round_up(n, m):
    return ((n + m - 1) // m) * m


def mlp_kernel(x_ref,
               w1_ref, b1_ref,
               w2_ref, b2_ref,
               w3_ref, b3_ref,
               w4_ref, b4_ref,
               w5_ref, b5_ref,
               o_ref):
    def layer(h_bf16, w_ref, b_ref, relu):
        acc = jnp.dot(h_bf16, w_ref[...], preferred_element_type=jnp.float32)
        acc = acc + b_ref[...]          # (1, N) f32 bias, VPU broadcast
        if relu:
            acc = jnp.maximum(acc, 0.0)
        return acc

    h = x_ref[...]                                              # bf16 (tm, K0)
    h = layer(h, w1_ref, b1_ref, True).astype(jnp.bfloat16)
    h = layer(h, w2_ref, b2_ref, True).astype(jnp.bfloat16)
    h = layer(h, w3_ref, b3_ref, True).astype(jnp.bfloat16)     # dropout -> id
    h = layer(h, w4_ref, b4_ref, True).astype(jnp.bfloat16)     # dropout -> id
    h = layer(h, w5_ref, b5_ref, False)                         # f32 out
    o_ref[...] = h.astype(o_ref.dtype)


@functools.partial(jax.jit, static_argnames=("tm",))
def mlp_forward(x, params, *, tm=128):
    """x: (B, input_size) f32. params: list of (W, b), W:(in,out), b:(1,out)."""
    B, in_size = x.shape
    out_size = params[-1][0].shape[1]

    # Clamp the batch tile for tiny batches (tile must stay a multiple of 8).
    tm = min(tm, _round_up(B, 8))
    B_p = _round_up(B, tm)

    # Lane-dense (multiple-of-128) feature dims.
    dims = [in_size] + [w.shape[1] for (w, _) in params]
    dims_p = [_round_up(d, 128) for d in dims]

    # Pad + cast x to bf16.
    x_p = jnp.zeros((B_p, dims_p[0]), jnp.bfloat16)
    x_p = x_p.at[:B, :in_size].set(x.astype(jnp.bfloat16))

    # Pad + cast weights (bf16) and biases (f32); build BlockSpecs.
    in_specs = [pl.BlockSpec((tm, dims_p[0]), lambda i: (i, 0))]
    weight_args = []
    for l, (w, b) in enumerate(params):
        kp, np_ = dims_p[l], dims_p[l + 1]
        w_p = jnp.zeros((kp, np_), jnp.bfloat16)
        w_p = w_p.at[:w.shape[0], :w.shape[1]].set(w.astype(jnp.bfloat16))
        b_p = jnp.zeros((1, np_), jnp.float32)
        b_p = b_p.at[:, :b.shape[1]].set(b.astype(jnp.float32))
        weight_args += [w_p, b_p]
        in_specs.append(pl.BlockSpec((kp, np_), lambda i: (0, 0)))   # resident
        in_specs.append(pl.BlockSpec((1, np_), lambda i: (0, 0)))    # resident

    # Cost estimate: 5 GEMMs over the padded problem.
    flops = 2 * B_p * sum(dims_p[l] * dims_p[l + 1] for l in range(5))
    bytes_accessed = int(
        x_p.size * 2
        + sum(int(a.size) * a.dtype.itemsize for a in weight_args)
        + B_p * dims_p[-1] * 4)
    cost = pl.CostEstimate(flops=flops, transcendentals=0,
                           bytes_accessed=bytes_accessed)

    # VMEM budget: resident (possibly double-buffered) weights + io tiles +
    # in-flight activations, with 2x headroom, clamped to 64 MiB (v7x phys).
    resident_bytes = sum(int(a.size) * a.dtype.itemsize for a in weight_args)
    tile_bytes = tm * dims_p[0] * 2 + tm * dims_p[-1] * 4
    act_bytes = tm * max(dims_p) * 4 * 4
    vmem_limit = int(min(max(2 * (2 * resident_bytes + 2 * tile_bytes + act_bytes),
                             32 * 1024 * 1024),
                         64 * 1024 * 1024))

    out_p = pl.pallas_call(
        mlp_kernel,
        out_shape=jax.ShapeDtypeStruct((B_p, dims_p[-1]), jnp.float32),
        grid_spec=pltpu.PrefetchScalarGridSpec(
            num_scalar_prefetch=0,
            grid=(B_p // tm,),
            in_specs=in_specs,
            out_specs=pl.BlockSpec((tm, dims_p[-1]), lambda i: (i, 0)),
        ),
        compiler_params=pltpu.CompilerParams(
            dimension_semantics=("parallel",),
            vmem_limit_bytes=vmem_limit),
        cost_estimate=cost,
    )(x_p, *weight_args)

    return out_p[:B, :out_size].astype(x.dtype)


def init_params(key, input_size, hidden_size, output_size):
    """Deterministic init mirroring nn.Linear's U(-1/sqrt(fan_in), +1/sqrt(fan_in))."""
    dims = [input_size,
            hidden_size,
            2 * hidden_size,
            4 * hidden_size,
            2 * hidden_size,
            output_size]
    params = []
    for l in range(5):
        fan_in, fan_out = dims[l], dims[l + 1]
        key, kw, kb = jax.random.split(key, 3)
        bound = 1.0 / jnp.sqrt(fan_in)
        w = jax.random.uniform(kw, (fan_in, fan_out), jnp.float32, -bound, bound)
        b = jax.random.uniform(kb, (1, fan_out), jnp.float32, -bound, bound)
        params.append((w, b))
    return params


def mlp_reference(x, params):
    """Pure-f32 reference (eval-mode dropout = identity)."""
    h = x
    for i, (w, b) in enumerate(params):
        h = h @ w + b
        if i < 4:
            h = jnp.maximum(h, 0.0)
    return h


if __name__ == "__main__":
    input_size, hidden_size, output_size = 32, 32, 16
    batch = 8

    key = jax.random.PRNGKey(0)
    key, kx = jax.random.split(key)
    x = jax.random.normal(kx, (batch, input_size), jnp.float32)
    params = init_params(key, input_size, hidden_size, output_size)

    out = mlp_forward(x, params)
    out = jax.block_until_ready(out)

    ref = mlp_reference(x, params)
    assert out.shape == (batch, output_size)
    # bf16 weights/activations (f32 accumulation) => loosened tolerance vs f32 ref.
    assert jnp.allclose(out, ref, atol=5e-2, rtol=5e-2), \
        float(jnp.max(jnp.abs(out - ref)))

    print("KERNEL_OK")
</pallas_src>

<mosaic_0001>
module attributes {stable_mosaic.version = 11 : i64} {
  func.func @mlp_kernel(%arg0: i32, %arg1: memref<8x128xbf16, #tpu.memory_space<vmem>>, %arg2: memref<128x128xbf16, #tpu.memory_space<vmem>>, %arg3: memref<1x128xf32, #tpu.memory_space<vmem>>, %arg4: memref<128x128xbf16, #tpu.memory_space<vmem>>, %arg5: memref<1x128xf32, #tpu.memory_space<vmem>>, %arg6: memref<128x128xbf16, #tpu.memory_space<vmem>>, %arg7: memref<1x128xf32, #tpu.memory_space<vmem>>, %arg8: memref<128x128xbf16, #tpu.memory_space<vmem>>, %arg9: memref<1x128xf32, #tpu.memory_space<vmem>>, %arg10: memref<128x128xbf16, #tpu.memory_space<vmem>>, %arg11: memref<1x128xf32, #tpu.memory_space<vmem>>, %arg12: memref<8x128xf32, #tpu.memory_space<vmem>>) attributes {dimension_semantics = [#tpu.dimension_semantics<parallel>], iteration_bounds = array<i64: 1>, scalar_prefetch = 0 : i64, scratch_operands = 0 : i64, tpu.core_type = #tpu.core_type<tc>, window_params = [{transform_indices = @transform_0, window_bounds = array<i64: 8, 128>}, {pipeline_mode = #tpu.pipeline_mode<synchronous>, transform_indices = @transform_1, window_bounds = array<i64: 128, 128>}, {pipeline_mode = #tpu.pipeline_mode<synchronous>, transform_indices = @transform_2, window_bounds = array<i64: 1, 128>}, {pipeline_mode = #tpu.pipeline_mode<synchronous>, transform_indices = @transform_3, window_bounds = array<i64: 128, 128>}, {pipeline_mode = #tpu.pipeline_mode<synchronous>, transform_indices = @transform_4, window_bounds = array<i64: 1, 128>}, {pipeline_mode = #tpu.pipeline_mode<synchronous>, transform_indices = @transform_5, window_bounds = array<i64: 128, 128>}, {pipeline_mode = #tpu.pipeline_mode<synchronous>, transform_indices = @transform_6, window_bounds = array<i64: 1, 128>}, {pipeline_mode = #tpu.pipeline_mode<synchronous>, transform_indices = @transform_7, window_bounds = array<i64: 128, 128>}, {pipeline_mode = #tpu.pipeline_mode<synchronous>, transform_indices = @transform_8, window_bounds = array<i64: 1, 128>}, {pipeline_mode = #tpu.pipeline_mode<synchronous>, transform_indices = @transform_9, window_bounds = array<i64: 128, 128>}, {pipeline_mode = #tpu.pipeline_mode<synchronous>, transform_indices = @transform_10, window_bounds = array<i64: 1, 128>}, {transform_indices = @transform_11, window_bounds = array<i64: 8, 128>}]} {
    %c0 = arith.constant 0 : index
    %c0_0 = arith.constant 0 : index
    %0 = vector.load %arg1[%c0, %c0_0] : memref<8x128xbf16, #tpu.memory_space<vmem>>, vector<8x128xbf16>
    %c0_1 = arith.constant 0 : index
    %c0_2 = arith.constant 0 : index
    %1 = vector.load %arg2[%c0_1, %c0_2] : memref<128x128xbf16, #tpu.memory_space<vmem>>, vector<128x128xbf16>
    %cst = arith.constant dense<0.000000e+00> : vector<8x128xf32>
    %2 = tpu.matmul %0, %1, %cst {dimension_numbers = #tpu.dot_dimension_numbers<[1], [0], [0], [1], [0, 0, 1, 1], [], []>} : vector<8x128xbf16>, vector<128x128xbf16>, vector<8x128xf32> -> vector<8x128xf32>
    %c0_3 = arith.constant 0 : index
    %c0_4 = arith.constant 0 : index
    %3 = vector.load %arg3[%c0_3, %c0_4] : memref<1x128xf32, #tpu.memory_space<vmem>>, vector<1x128xf32>
    %4 = vector.broadcast %3 : vector<1x128xf32> to vector<8x128xf32>
    %5 = arith.addf %2, %4 : vector<8x128xf32>
    %cst_5 = arith.constant 0.000000e+00 : f32
    %6 = vector.broadcast %cst_5 : f32 to vector<8x128xf32>
    %7 = arith.maximumf %5, %6 : vector<8x128xf32>
    %8 = arith.truncf %7 : vector<8x128xf32> to vector<8x128xbf16>
    %c0_6 = arith.constant 0 : index
    %c0_7 = arith.constant 0 : index
    %9 = vector.load %arg4[%c0_6, %c0_7] : memref<128x128xbf16, #tpu.memory_space<vmem>>, vector<128x128xbf16>
    %cst_8 = arith.constant dense<0.000000e+00> : vector<8x128xf32>
    %10 = tpu.matmul %8, %9, %cst_8 {dimension_numbers = #tpu.dot_dimension_numbers<[1], [0], [0], [1], [0, 0, 1, 1], [], []>} : vector<8x128xbf16>, vector<128x128xbf16>, vector<8x128xf32> -> vector<8x128xf32>
    %c0_9 = arith.constant 0 : index
    %c0_10 = arith.constant 0 : index
    %11 = vector.load %arg5[%c0_9, %c0_10] : memref<1x128xf32, #tpu.memory_space<vmem>>, vector<1x128xf32>
    %12 = vector.broadcast %11 : vector<1x128xf32> to vector<8x128xf32>
    %13 = arith.addf %10, %12 : vector<8x128xf32>
    %cst_11 = arith.constant 0.000000e+00 : f32
    %14 = vector.broadcast %cst_11 : f32 to vector<8x128xf32>
    %15 = arith.maximumf %13, %14 : vector<8x128xf32>
    %16 = arith.truncf %15 : vector<8x128xf32> to vector<8x128xbf16>
    %c0_12 = arith.constant 0 : index
    %c0_13 = arith.constant 0 : index
    %17 = vector.load %arg6[%c0_12, %c0_13] : memref<128x128xbf16, #tpu.memory_space<vmem>>, vector<128x128xbf16>
    %cst_14 = arith.constant dense<0.000000e+00> : vector<8x128xf32>
    %18 = tpu.matmul %16, %17, %cst_14 {dimension_numbers = #tpu.dot_dimension_numbers<[1], [0], [0], [1], [0, 0, 1, 1], [], []>} : vector<8x128xbf16>, vector<128x128xbf16>, vector<8x128xf32> -> vector<8x128xf32>
    %c0_15 = arith.constant 0 : index
    %c0_16 = arith.constant 0 : index
    %19 = vector.load %arg7[%c0_15, %c0_16] : memref<1x128xf32, #tpu.memory_space<vmem>>, vector<1x128xf32>
    %20 = vector.broadcast %19 : vector<1x128xf32> to vector<8x128xf32>
    %21 = arith.addf %18, %20 : vector<8x128xf32>
    %cst_17 = arith.constant 0.000000e+00 : f32
    %22 = vector.broadcast %cst_17 : f32 to vector<8x128xf32>
    %23 = arith.maximumf %21, %22 : vector<8x128xf32>
    %24 = arith.truncf %23 : vector<8x128xf32> to vector<8x128xbf16>
    %c0_18 = arith.constant 0 : index
    %c0_19 = arith.constant 0 : index
    %25 = vector.load %arg8[%c0_18, %c0_19] : memref<128x128xbf16, #tpu.memory_space<vmem>>, vector<128x128xbf16>
    %cst_20 = arith.constant dense<0.000000e+00> : vector<8x128xf32>
    %26 = tpu.matmul %24, %25, %cst_20 {dimension_numbers = #tpu.dot_dimension_numbers<[1], [0], [0], [1], [0, 0, 1, 1], [], []>} : vector<8x128xbf16>, vector<128x128xbf16>, vector<8x128xf32> -> vector<8x128xf32>
    %c0_21 = arith.constant 0 : index
    %c0_22 = arith.constant 0 : index
    %27 = vector.load %arg9[%c0_21, %c0_22] : memref<1x128xf32, #tpu.memory_space<vmem>>, vector<1x128xf32>
    %28 = vector.broadcast %27 : vector<1x128xf32> to vector<8x128xf32>
    %29 = arith.addf %26, %28 : vector<8x128xf32>
    %cst_23 = arith.constant 0.000000e+00 : f32
    %30 = vector.broadcast %cst_23 : f32 to vector<8x128xf32>
    %31 = arith.maximumf %29, %30 : vector<8x128xf32>
    %32 = arith.truncf %31 : vector<8x128xf32> to vector<8x128xbf16>
    %c0_24 = arith.constant 0 : index
    %c0_25 = arith.constant 0 : index
    %33 = vector.load %arg10[%c0_24, %c0_25] : memref<128x128xbf16, #tpu.memory_space<vmem>>, vector<128x128xbf16>
    %cst_26 = arith.constant dense<0.000000e+00> : vector<8x128xf32>
    %34 = tpu.matmul %32, %33, %cst_26 {dimension_numbers = #tpu.dot_dimension_numbers<[1], [0], [0], [1], [0, 0, 1, 1], [], []>} : vector<8x128xbf16>, vector<128x128xbf16>, vector<8x128xf32> -> vector<8x128xf32>
    %c0_27 = arith.constant 0 : index
    %c0_28 = arith.constant 0 : index
    %35 = vector.load %arg11[%c0_27, %c0_28] : memref<1x128xf32, #tpu.memory_space<vmem>>, vector<1x128xf32>
    %36 = vector.broadcast %35 : vector<1x128xf32> to vector<8x128xf32>
    %37 = arith.addf %34, %36 : vector<8x128xf32>
    %c0_29 = arith.constant 0 : index
    %c0_30 = arith.constant 0 : index
    %38 = vector.load %arg12[%c0_29, %c0_30] : memref<8x128xf32, #tpu.memory_space<vmem>>, vector<8x128xf32>
    tpu.vector_store %arg12[%c0_29, %c0_30], %37 {strides = array<i32>} : memref<8x128xf32, #tpu.memory_space<vmem>>, vector<8x128xf32>,
    return
  }
  func.func @transform_0(%arg0: i32) -> (i32, i32) {
    %c0_i32 = arith.constant 0 : i32
    %c0_i32_0 = arith.constant 0 : i32
    return %arg0, %c0_i32 : i32, i32
  }
  func.func @transform_1(%arg0: i32) -> (i32, i32) {
    %c0_i32 = arith.constant 0 : i32
    %c0_i32_0 = arith.constant 0 : i32
    %c0_i32_1 = arith.constant 0 : i32
    return %c0_i32, %c0_i32_0 : i32, i32
  }
  func.func @transform_2(%arg0: i32) -> (i32, i32) {
    %c0_i32 = arith.constant 0 : i32
    %c0_i32_0 = arith.constant 0 : i32
    %c0_i32_1 = arith.constant 0 : i32
    return %c0_i32, %c0_i32_0 : i32, i32
  }
  func.func @transform_3(%arg0: i32) -> (i32, i32) {
    %c0_i32 = arith.constant 0 : i32
    %c0_i32_0 = arith.constant 0 : i32
    %c0_i32_1 = arith.constant 0 : i32
    return %c0_i32, %c0_i32_0 : i32, i32
  }
  func.func @transform_4(%arg0: i32) -> (i32, i32) {
    %c0_i32 = arith.constant 0 : i32
    %c0_i32_0 = arith.constant 0 : i32
    %c0_i32_1 = arith.constant 0 : i32
    return %c0_i32, %c0_i32_0 : i32, i32
  }
  func.func @transform_5(%arg0: i32) -> (i32, i32) {
    %c0_i32 = arith.constant 0 : i32
    %c0_i32_0 = arith.constant 0 : i32
    %c0_i32_1 = arith.constant 0 : i32
    return %c0_i32, %c0_i32_0 : i32, i32
  }
  func.func @transform_6(%arg0: i32) -> (i32, i32) {
    %c0_i32 = arith.constant 0 : i32
    %c0_i32_0 = arith.constant 0 : i32
    %c0_i32_1 = arith.constant 0 : i32
    return %c0_i32, %c0_i32_0 : i32, i32
  }
  func.func @transform_7(%arg0: i32) -> (i32, i32) {
    %c0_i32 = arith.constant 0 : i32
    %c0_i32_0 = arith.constant 0 : i32
    %c0_i32_1 = arith.constant 0 : i32
    return %c0_i32, %c0_i32_0 : i32, i32
  }
  func.func @transform_8(%arg0: i32) -> (i32, i32) {
    %c0_i32 = arith.constant 0 : i32
    %c0_i32_0 = arith.constant 0 : i32
    %c0_i32_1 = arith.constant 0 : i32
    return %c0_i32, %c0_i32_0 : i32, i32
  }
  func.func @transform_9(%arg0: i32) -> (i32, i32) {
    %c0_i32 = arith.constant 0 : i32
    %c0_i32_0 = arith.constant 0 : i32
    %c0_i32_1 = arith.constant 0 : i32
    return %c0_i32, %c0_i32_0 : i32, i32
  }
  func.func @transform_10(%arg0: i32) -> (i32, i32) {
    %c0_i32 = arith.constant 0 : i32
    %c0_i32_0 = arith.constant 0 : i32
    %c0_i32_1 = arith.constant 0 : i32
    return %c0_i32, %c0_i32_0 : i32, i32
  }
  func.func @transform_11(%arg0: i32) -> (i32, i32) {
    %c0_i32 = arith.constant 0 : i32
    %c0_i32_0 = arith.constant 0 : i32
    return %arg0, %c0_i32 : i32, i32
  }
}

</mosaic_0001>

<llo_original>
// kernel: mlp_forward.1
$region0: #{mlp_forward.1}
  #allocation0 [shape = 'u32[]', space=smem, size = 0x4, offset = 0x4, fixed_abs, tag = 'smem constant byte address 0x4 - core index']
  #allocation1 [shape = 'u32[72,128]{1,0:T(1,128)}', space=vmem, size = 0x9000, scoped, tag = 'internal scratch']
  %s0 = inlined_call_operand.vmem [shape: bf16[8,128], index: 0, kind: input, shape index: {}]
  %s1 = inlined_call_operand.vmem [shape: bf16[128,128], index: 1, kind: input, shape index: {}]
  %s2 = inlined_call_operand.vmem [shape: f32[1,128], index: 2, kind: input, shape index: {}]
  %s3 = inlined_call_operand.vmem [shape: bf16[128,128], index: 3, kind: input, shape index: {}]
  %s4 = inlined_call_operand.vmem [shape: f32[1,128], index: 4, kind: input, shape index: {}]
  %s5 = inlined_call_operand.vmem [shape: bf16[128,128], index: 5, kind: input, shape index: {}]
  %s6 = inlined_call_operand.vmem [shape: f32[1,128], index: 6, kind: input, shape index: {}]
  %s7 = inlined_call_operand.vmem [shape: bf16[128,128], index: 7, kind: input, shape index: {}]
  %s8 = inlined_call_operand.vmem [shape: f32[1,128], index: 8, kind: input, shape index: {}]
  %s9 = inlined_call_operand.vmem [shape: bf16[128,128], index: 9, kind: input, shape index: {}]
  %s10 = inlined_call_operand.vmem [shape: f32[1,128], index: 10, kind: input, shape index: {}]
  %s11 = inlined_call_operand.hbm [shape: f32[8,128], index: 11, kind: output, shape index: {}]
  %s12 = sld [smem:[#allocation0]]
  $region54: #{mlp_forward.1} parent=0
    _
  %s14 = ssub.s32 1, %s12
  %s15 = scalar_select 0, %s14, %s12
  $region1: #{mlp_forward.1} parent=0
    #allocation2 [shape = 'u8[4096]{0}', space=vmem, size = 0x1000, scoped, tag = 'output window, operand 0, single buffered']
    #allocation3 [shape = 's32[1]{0}', space=sflag, size = 0x4, scoped, tag = 'scoped memory for mlp_forward.1']
    %16 = vsyncpa [#allocation3], 0
    // Predicated region
    $region2: #{mlp_forward.1} parent=1 // pred_check
      _
    $region3: #{mlp_forward.1} parent=1 // pred_check_branch
      %18 = sbr.rel (0) target = $region5
    $region4: #{mlp_forward.1} parent=1 // pred_region
      _
    $region5: #{mlp_forward.1} parent=1 // pred_fallthru
      _
    // Predicated region
    $region6: #{mlp_forward.1} parent=1 // pred_check
      _
    $region7: #{mlp_forward.1} parent=1 // pred_check_branch
      %20 = sbr.rel (0) target = $region9
    $region8: #{mlp_forward.1} parent=1 // pred_region
      _
    $region9: #{mlp_forward.1} parent=1 // pred_fallthru
      _
    // Predicated region
    $region10: #{mlp_forward.1} parent=1 // pred_check
      _
    $region11: #{mlp_forward.1} parent=1 // pred_check_branch
      %22 = sbr.rel (0) target = $region13
    $region12: #{mlp_forward.1} parent=1 // pred_region
      _
    $region13: #{mlp_forward.1} parent=1 // pred_fallthru
      _
    // Predicated region
    $region14: #{mlp_forward.1} parent=1 // pred_check
      _
    $region15: #{mlp_forward.1} parent=1 // pred_check_branch
      %24 = sbr.rel (0) target = $region17
    $region16: #{mlp_forward.1} parent=1 // pred_region
      _
    $region17: #{mlp_forward.1} parent=1 // pred_fallthru
      _
    // Predicated region
    $region18: #{mlp_forward.1} parent=1 // pred_check
      _
    $region19: #{mlp_forward.1} parent=1 // pred_check_branch
      %26 = sbr.rel (0) target = $region21
    $region20: #{mlp_forward.1} parent=1 // pred_region
      _
    $region21: #{mlp_forward.1} parent=1 // pred_fallthru
      _
    // Predicated region
    $region22: #{mlp_forward.1} parent=1 // pred_check
      _
    $region23: #{mlp_forward.1} parent=1 // pred_check_branch
      %28 = sbr.rel (0) target = $region25
    $region24: #{mlp_forward.1} parent=1 // pred_region
      _
    $region25: #{mlp_forward.1} parent=1 // pred_fallthru
      _
    // Predicated region
    $region26: #{mlp_forward.1} parent=1 // pred_check
      _
    $region27: #{mlp_forward.1} parent=1 // pred_check_branch
      %30 = sbr.rel (0) target = $region29
    $region28: #{mlp_forward.1} parent=1 // pred_region
      _
    $region29: #{mlp_forward.1} parent=1 // pred_fallthru
      _
    // Predicated region
    $region30: #{mlp_forward.1} parent=1 // pred_check
      _
    $region31: #{mlp_forward.1} parent=1 // pred_check_branch
      %32 = sbr.rel (0) target = $region33
    $region32: #{mlp_forward.1} parent=1 // pred_region
      _
    $region33: #{mlp_forward.1} parent=1 // pred_fallthru
      _
    // Predicated region
    $region34: #{mlp_forward.1} parent=1 // pred_check
      _
    $region35: #{mlp_forward.1} parent=1 // pred_check_branch
      %34 = sbr.rel (0) target = $region37
    $region36: #{mlp_forward.1} parent=1 // pred_region
      _
    $region37: #{mlp_forward.1} parent=1 // pred_fallthru
      _
    // Predicated region
    $region38: #{mlp_forward.1} parent=1 // pred_check
      _
    $region39: #{mlp_forward.1} parent=1 // pred_check_branch
      %36 = sbr.rel (0) target = $region41
    $region40: #{mlp_forward.1} parent=1 // pred_region
      _
    $region41: #{mlp_forward.1} parent=1 // pred_fallthru
      _
    // Predicated region
    $region42: #{mlp_forward.1} parent=1 // pred_check
      _
    $region43: #{mlp_forward.1} parent=1 // pred_check_branch
      %38 = sbr.rel (0) target = $region45
    $region44: #{mlp_forward.1} parent=1 // pred_region
      _
    $region45: #{mlp_forward.1} parent=1 // pred_fallthru
      _
    %v39 = vld [vmem:[%s0] sm:$0xf]
    %v40 = vld [vmem:[%s1] sm:$0xf]
    %v41 = vld [vmem:[%s1 + $0x4] sm:$0xf]
    %v42 = vld [vmem:[%s1 + $0x8] sm:$0xf]
    %v43 = vld [vmem:[%s1 + $0xc] sm:$0xf]
    %v44 = vld [vmem:[%s1 + $0x10] sm:$0xf]
    %v45 = vld [vmem:[%s1 + $0x14] sm:$0xf]
    %v46 = vld [vmem:[%s1 + $0x18] sm:$0xf]
    %v47 = vld [vmem:[%s1 + $0x1c] sm:$0xf]
    %v48 = vld [vmem:[%s1 + $0x20] sm:$0xf]
    %v49 = vld [vmem:[%s1 + $0x24] sm:$0xf]
    %v50 = vld [vmem:[%s1 + $0x28] sm:$0xf]
    %v51 = vld [vmem:[%s1 + $0x2c] sm:$0xf]
    %v52 = vld [vmem:[%s1 + $0x30] sm:$0xf]
    %v53 = vld [vmem:[%s1 + $0x34] sm:$0xf]
    %v54 = vld [vmem:[%s1 + $0x38] sm:$0xf]
    %v55 = vld [vmem:[%s1 + $0x3c] sm:$0xf]
    %v56 = vld [vmem:[%s2] sm:$0x1]
    %v58 = vperm.slane %v56, 0
    %v76 = vunpack.c.l.b16 %v40
    %v77 = vunpack.c.l.b16 %v41
    %v78 = vunpack.c.l.b16 %v42
    %v79 = vunpack.c.l.b16 %v43
    %v80 = vunpack.c.l.b16 %v44
    %v81 = vunpack.c.l.b16 %v45
    %v82 = vunpack.c.l.b16 %v46
    %v83 = vunpack.c.l.b16 %v47
    %v84 = vunpack.c.l.b16 %v48
    %v85 = vunpack.c.l.b16 %v49
    %v86 = vunpack.c.l.b16 %v50
    %v87 = vunpack.c.l.b16 %v51
    %v88 = vunpack.c.l.b16 %v52
    %v89 = vunpack.c.l.b16 %v53
    %v90 = vunpack.c.l.b16 %v54
    %v91 = vunpack.c.l.b16 %v55
    %v92 = vpack.c.b16 %v77, %v76
    %v93 = vpack.c.b16 %v79, %v78
    %v94 = vpack.c.b16 %v81, %v80
    %v95 = vpack.c.b16 %v83, %v82
    %v96 = vpack.c.b16 %v85, %v84
    %v97 = vpack.c.b16 %v87, %v86
    %v98 = vpack.c.b16 %v89, %v88
    %v99 = vpack.c.b16 %v91, %v90
    %108 = vmatpush.bf16.msra.mxu0 %v99
    %109 = vmatpush.bf16.msra.mxu0 %v98
    %110 = vmatpush.bf16.msra.mxu0 %v97
    %111 = vmatpush.bf16.msra.mxu0 %v96
    %112 = vmatpush.bf16.msra.mxu0 %v95
    %113 = vmatpush.bf16.msra.mxu0 %v94
    %114 = vmatpush.bf16.msra.mxu0 %v93
    %115 = vmatpush.bf16.msra.mxu0 %v92
    %116 = vmatmul.bf16.gmra.mxu0 %v39
    %v117 = vpop.f32.mrf.mxu0
    %v118 = vadd.f32 %v58, %v117
    %v119 = vpop.f32.mrf.mxu0
    %120 = vdwg.mxu0
    %v121 = vmax.f32 %v118, 0.0
    %v122 = vpack.c.bf16 %v121, %v121
    %v123 = vld [vmem:[%s3] sm:$0xf]
    %v124 = vld [vmem:[%s3 + $0x4] sm:$0xf]
    %v125 = vld [vmem:[%s3 + $0x8] sm:$0xf]
    %v126 = vld [vmem:[%s3 + $0xc] sm:$0xf]
    %v127 = vld [vmem:[%s3 + $0x10] sm:$0xf]
    %v128 = vld [vmem:[%s3 + $0x14] sm:$0xf]
    %v129 = vld [vmem:[%s3 + $0x18] sm:$0xf]
    %v130 = vld [vmem:[%s3 + $0x1c] sm:$0xf]
    %v131 = vld [vmem:[%s3 + $0x20] sm:$0xf]
    %v132 = vld [vmem:[%s3 + $0x24] sm:$0xf]
    %v133 = vld [vmem:[%s3 + $0x28] sm:$0xf]
    %v134 = vld [vmem:[%s3 + $0x2c] sm:$0xf]
    %v135 = vld [vmem:[%s3 + $0x30] sm:$0xf]
    %v136 = vld [vmem:[%s3 + $0x34] sm:$0xf]
    %v137 = vld [vmem:[%s3 + $0x38] sm:$0xf]
    %v138 = vld [vmem:[%s3 + $0x3c] sm:$0xf]
    %v139 = vld [vmem:[%s4] sm:$0x1]
    %v141 = vperm.slane %v139, 0
    %v159 = vunpack.c.l.b16 %v123
    %v160 = vunpack.c.l.b16 %v124
    %v161 = vunpack.c.l.b16 %v125
    %v162 = vunpack.c.l.b16 %v126
    %v163 = vunpack.c.l.b16 %v127
    %v164 = vunpack.c.l.b16 %v128
    %v165 = vunpack.c.l.b16 %v129
    %v166 = vunpack.c.l.b16 %v130
    %v167 = vunpack.c.l.b16 %v131
    %v168 = vunpack.c.l.b16 %v132
    %v169 = vunpack.c.l.b16 %v133
    %v170 = vunpack.c.l.b16 %v134
    %v171 = vunpack.c.l.b16 %v135
    %v172 = vunpack.c.l.b16 %v136
    %v173 = vunpack.c.l.b16 %v137
    %v174 = vunpack.c.l.b16 %v138
    %v175 = vpack.c.b16 %v160, %v159
    %v176 = vpack.c.b16 %v162, %v161
    %v177 = vpack.c.b16 %v164, %v163
    %v178 = vpack.c.b16 %v166, %v165
    %v179 = vpack.c.b16 %v168, %v167
    %v180 = vpack.c.b16 %v170, %v169
    %v181 = vpack.c.b16 %v172, %v171
    %v182 = vpack.c.b16 %v174, %v173
    %191 = vmatpush.bf16.msra.mxu0 %v182
    %192 = vmatpush.bf16.msra.mxu0 %v181
    %193 = vmatpush.bf16.msra.mxu0 %v180
    %194 = vmatpush.bf16.msra.mxu0 %v179
    %195 = vmatpush.bf16.msra.mxu0 %v178
    %196 = vmatpush.bf16.msra.mxu0 %v177
    %197 = vmatpush.bf16.msra.mxu0 %v176
    %198 = vmatpush.bf16.msra.mxu0 %v175
    %199 = vmatmul.bf16.gmra.mxu0 %v122
    %v200 = vpop.f32.mrf.mxu0
    %v201 = vadd.f32 %v141, %v200
    %v202 = vpop.f32.mrf.mxu0
    %203 = vdwg.mxu0
    %v204 = vmax.f32 %v201, 0.0
    %v205 = vpack.c.bf16 %v204, %v204
    %v206 = vld [vmem:[%s5] sm:$0xf]
    %v207 = vld [vmem:[%s5 + $0x4] sm:$0xf]
    %v208 = vld [vmem:[%s5 + $0x8] sm:$0xf]
    %v209 = vld [vmem:[%s5 + $0xc] sm:$0xf]
    %v210 = vld [vmem:[%s5 + $0x10] sm:$0xf]
    %v211 = vld [vmem:[%s5 + $0x14] sm:$0xf]
    %v212 = vld [vmem:[%s5 + $0x18] sm:$0xf]
    %v213 = vld [vmem:[%s5 + $0x1c] sm:$0xf]
    %v214 = vld [vmem:[%s5 + $0x20] sm:$0xf]
    %v215 = vld [vmem:[%s5 + $0x24] sm:$0xf]
    %v216 = vld [vmem:[%s5 + $0x28] sm:$0xf]
    %v217 = vld [vmem:[%s5 + $0x2c] sm:$0xf]
    %v218 = vld [vmem:[%s5 + $0x30] sm:$0xf]
    %v219 = vld [vmem:[%s5 + $0x34] sm:$0xf]
    %v220 = vld [vmem:[%s5 + $0x38] sm:$0xf]
    %v221 = vld [vmem:[%s5 + $0x3c] sm:$0xf]
    %v222 = vld [vmem:[%s6] sm:$0x1]
    %v224 = vperm.slane %v222, 0
    %v242 = vunpack.c.l.b16 %v206
    %v243 = vunpack.c.l.b16 %v207
    %v244 = vunpack.c.l.b16 %v208
    %v245 = vunpack.c.l.b16 %v209
    %v246 = vunpack.c.l.b16 %v210
    %v247 = vunpack.c.l.b16 %v211
    %v248 = vunpack.c.l.b16 %v212
    %v249 = vunpack.c.l.b16 %v213
    %v250 = vunpack.c.l.b16 %v214
    %v251 = vunpack.c.l.b16 %v215
    %v252 = vunpack.c.l.b16 %v216
    %v253 = vunpack.c.l.b16 %v217
    %v254 = vunpack.c.l.b16 %v218
    %v255 = vunpack.c.l.b16 %v219
    %v256 = vunpack.c.l.b16 %v220
    %v257 = vunpack.c.l.b16 %v221
    %v258 = vpack.c.b16 %v243, %v242
    %v259 = vpack.c.b16 %v245, %v244
    %v260 = vpack.c.b16 %v247, %v246
    %v261 = vpack.c.b16 %v249, %v248
    %v262 = vpack.c.b16 %v251, %v250
    %v263 = vpack.c.b16 %v253, %v252
    %v264 = vpack.c.b16 %v255, %v254
    %v265 = vpack.c.b16 %v257, %v256
    %274 = vmatpush.bf16.msra.mxu0 %v265
    %275 = vmatpush.bf16.msra.mxu0 %v264
    %276 = vmatpush.bf16.msra.mxu0 %v263
    %277 = vmatpush.bf16.msra.mxu0 %v262
    %278 = vmatpush.bf16.msra.mxu0 %v261
    %279 = vmatpush.bf16.msra.mxu0 %v260
    %280 = vmatpush.bf16.msra.mxu0 %v259
    %281 = vmatpush.bf16.msra.mxu0 %v258
    %282 = vmatmul.bf16.gmra.mxu0 %v205
    %v283 = vpop.f32.mrf.mxu0
    %v284 = vadd.f32 %v224, %v283
    %v285 = vpop.f32.mrf.mxu0
    %286 = vdwg.mxu0
    %v287 = vmax.f32 %v284, 0.0
    %v288 = vpack.c.bf16 %v287, %v287
    %v289 = vld [vmem:[%s7] sm:$0xf]
    %v290 = vld [vmem:[%s7 + $0x4] sm:$0xf]
    %v291 = vld [vmem:[%s7 + $0x8] sm:$0xf]
    %v292 = vld [vmem:[%s7 + $0xc] sm:$0xf]
    %v293 = vld [vmem:[%s7 + $0x10] sm:$0xf]
    %v294 = vld [vmem:[%s7 + $0x14] sm:$0xf]
    %v295 = vld [vmem:[%s7 + $0x18] sm:$0xf]
    %v296 = vld [vmem:[%s7 + $0x1c] sm:$0xf]
    %v297 = vld [vmem:[%s7 + $0x20] sm:$0xf]
    %v298 = vld [vmem:[%s7 + $0x24] sm:$0xf]
    %v299 = vld [vmem:[%s7 + $0x28] sm:$0xf]
    %v300 = vld [vmem:[%s7 + $0x2c] sm:$0xf]
    %v301 = vld [vmem:[%s7 + $0x30] sm:$0xf]
    %v302 = vld [vmem:[%s7 + $0x34] sm:$0xf]
    %v303 = vld [vmem:[%s7 + $0x38] sm:$0xf]
    %v304 = vld [vmem:[%s7 + $0x3c] sm:$0xf]
    %v305 = vld [vmem:[%s8] sm:$0x1]
    %v307 = vperm.slane %v305, 0
    %v325 = vunpack.c.l.b16 %v289
    %v326 = vunpack.c.l.b16 %v290
    %v327 = vunpack.c.l.b16 %v291
    %v328 = vunpack.c.l.b16 %v292
    %v329 = vunpack.c.l.b16 %v293
    %v330 = vunpack.c.l.b16 %v294
    %v331 = vunpack.c.l.b16 %v295
    %v332 = vunpack.c.l.b16 %v296
    %v333 = vunpack.c.l.b16 %v297
    %v334 = vunpack.c.l.b16 %v298
    %v335 = vunpack.c.l.b16 %v299
    %v336 = vunpack.c.l.b16 %v300
    %v337 = vunpack.c.l.b16 %v301
    %v338 = vunpack.c.l.b16 %v302
    %v339 = vunpack.c.l.b16 %v303
    %v340 = vunpack.c.l.b16 %v304
    %v341 = vpack.c.b16 %v326, %v325
    %v342 = vpack.c.b16 %v328, %v327
    %v343 = vpack.c.b16 %v330, %v329
    %v344 = vpack.c.b16 %v332, %v331
    %v345 = vpack.c.b16 %v334, %v333
    %v346 = vpack.c.b16 %v336, %v335
    %v347 = vpack.c.b16 %v338, %v337
    %v348 = vpack.c.b16 %v340, %v339
    %357 = vmatpush.bf16.msra.mxu0 %v348
    %358 = vmatpush.bf16.msra.mxu0 %v347
    %359 = vmatpush.bf16.msra.mxu0 %v346
    %360 = vmatpush.bf16.msra.mxu0 %v345
    %361 = vmatpush.bf16.msra.mxu0 %v344
    %362 = vmatpush.bf16.msra.mxu0 %v343
    %363 = vmatpush.bf16.msra.mxu0 %v342
    %364 = vmatpush.bf16.msra.mxu0 %v341
    %365 = vmatmul.bf16.gmra.mxu0 %v288
    %v366 = vpop.f32.mrf.mxu0
    %v367 = vadd.f32 %v307, %v366
    %v368 = vpop.f32.mrf.mxu0
    %369 = vdwg.mxu0
    %v370 = vmax.f32 %v367, 0.0
    %v371 = vpack.c.bf16 %v370, %v370
    %v372 = vld [vmem:[%s9] sm:$0xf]
    %v373 = vld [vmem:[%s9 + $0x4] sm:$0xf]
    %v374 = vld [vmem:[%s9 + $0x8] sm:$0xf]
    %v375 = vld [vmem:[%s9 + $0xc] sm:$0xf]
    %v376 = vld [vmem:[%s9 + $0x10] sm:$0xf]
    %v377 = vld [vmem:[%s9 + $0x14] sm:$0xf]
    %v378 = vld [vmem:[%s9 + $0x18] sm:$0xf]
    %v379 = vld [vmem:[%s9 + $0x1c] sm:$0xf]
    %v380 = vld [vmem:[%s9 + $0x20] sm:$0xf]
    %v381 = vld [vmem:[%s9 + $0x24] sm:$0xf]
    %v382 = vld [vmem:[%s9 + $0x28] sm:$0xf]
    %v383 = vld [vmem:[%s9 + $0x2c] sm:$0xf]
    %v384 = vld [vmem:[%s9 + $0x30] sm:$0xf]
    %v385 = vld [vmem:[%s9 + $0x34] sm:$0xf]
    %v386 = vld [vmem:[%s9 + $0x38] sm:$0xf]
    %v387 = vld [vmem:[%s9 + $0x3c] sm:$0xf]
    %v388 = vld [vmem:[%s10] sm:$0x1]
    %v390 = vperm.slane %v388, 0
    %v408 = vunpack.c.l.b16 %v372
    %v409 = vunpack.c.l.b16 %v373
    %v410 = vunpack.c.l.b16 %v374
    %v411 = vunpack.c.l.b16 %v375
    %v412 = vunpack.c.l.b16 %v376
    %v413 = vunpack.c.l.b16 %v377
    %v414 = vunpack.c.l.b16 %v378
    %v415 = vunpack.c.l.b16 %v379
    %v416 = vunpack.c.l.b16 %v380
    %v417 = vunpack.c.l.b16 %v381
    %v418 = vunpack.c.l.b16 %v382
    %v419 = vunpack.c.l.b16 %v383
    %v420 = vunpack.c.l.b16 %v384
    %v421 = vunpack.c.l.b16 %v385
    %v422 = vunpack.c.l.b16 %v386
    %v423 = vunpack.c.l.b16 %v387
    %v424 = vpack.c.b16 %v409, %v408
    %v425 = vpack.c.b16 %v411, %v410
    %v426 = vpack.c.b16 %v413, %v412
    %v427 = vpack.c.b16 %v415, %v414
    %v428 = vpack.c.b16 %v417, %v416
    %v429 = vpack.c.b16 %v419, %v418
    %v430 = vpack.c.b16 %v421, %v420
    %v431 = vpack.c.b16 %v423, %v422
    %440 = vmatpush.bf16.msra.mxu0 %v431
    %441 = vmatpush.bf16.msra.mxu0 %v430
    %442 = vmatpush.bf16.msra.mxu0 %v429
    %443 = vmatpush.bf16.msra.mxu0 %v428
    %444 = vmatpush.bf16.msra.mxu0 %v427
    %445 = vmatpush.bf16.msra.mxu0 %v426
    %446 = vmatpush.bf16.msra.mxu0 %v425
    %447 = vmatpush.bf16.msra.mxu0 %v424
    %448 = vmatmul.bf16.gmra.mxu0 %v371
    %v449 = vpop.f32.mrf.mxu0
    %v450 = vadd.f32 %v390, %v449
    %v451 = vpop.f32.mrf.mxu0
    %452 = vdwg.mxu0
    %453 = vst [vmem:[#allocation2] sm:$0xff] %v450
    // Predicated region
    $region46: #{mlp_forward.1} parent=1 // pred_check
      _
    $region47: #{mlp_forward.1} parent=1 // pred_check_branch
      %455 = sbr.rel (0) target = $region49
    $region48: #{mlp_forward.1} parent=1 // pred_region
      %457 = vsyncadd [#allocation3], 0
      %s459 = sshll.u32 [#allocation2], 4
      %s460 = int_to_ptr.vmem [resolvable:$true] %s459
      %s461 = sshll.u32 %s11, 4
      %s462 = int_to_ptr.hbm [resolvable:$true] %s461
      %464 = dma.vmem_to_hbm [thread:$0]  %s460, 128, %s462, [#allocation3]
    $region49: #{mlp_forward.1} parent=1 // pred_fallthru
      _
    // Predicated region
    $region50: #{mlp_forward.1} parent=1 // pred_check
      _
    $region51: #{mlp_forward.1} parent=1 // pred_check_branch
      %466 = sbr.rel (0) target = $region53
    $region52: #{mlp_forward.1} parent=1 // pred_region
      %468 = dma.done [#allocation3], 128
    $region53: #{mlp_forward.1} parent=1 // pred_fallthru
      _
    %469 = vsyncpa [#allocation3], 1

</llo_original>
